<compile_context>
chip_gen: v7x
topology: tpu7x:2x2x1
jax: 0.10.0
libtpu: 0.0.40
codegen_flags: <defaults>
</compile_context>

<pallas_src>
import functools

import jax
import jax.numpy as jnp
from jax.experimental import pallas as pl
from jax.experimental.pallas import tpu as pltpu


def _round_up(x, m):
    return ((x + m - 1) // m) * m


def _vmem_capacity_bytes():
    try:
        cap = int(pltpu.get_tpu_info().vmem_capacity_bytes)
        if cap > 0:
            return cap
    except Exception:
        pass
    return 64 << 20  # conservative fallback: v7x per-TC VMEM (smallest gen)


def _weight_ce_kernel(inputs_ref, targets_ref, wt_ref, out_ref,
                      m_ref, l_ref, xg_ref, *, num_classes, num_rows, ragged):
    i = pl.program_id(0)                 # batch-tile index ("parallel")
    j = pl.program_id(1)                 # class-tile index ("arbitrary" reduction)
    n_class_tiles = pl.num_programs(1)

    tB, tC = inputs_ref.shape

    @pl.when(j == 0)
    def _init():
        m_ref[...] = jnp.full_like(m_ref, -jnp.inf)
        l_ref[...] = jnp.zeros_like(l_ref)
        xg_ref[...] = jnp.zeros_like(xg_ref)

    # Keep element-wise work in the input dtype (bf16 stays bf16 on v6e/v7x
    # VPU/EUP); only the (tB,1) running state below is f32.
    x = inputs_ref[...]                                   # (tB, tC) input dtype
    tgt = targets_ref[...]                                # (tB, 1) int32

    # Lane index within this class tile only; the global shift lives on the
    # scalar / (tB,1) side, so no full (tB,tC) int32 `col` tensor is built.
    lane = jax.lax.broadcasted_iota(jnp.int32, (tB, tC), 1)

    if ragged:
        # Only emitted when C % tC != 0: mask the garbage lanes of the padded
        # last class tile out of the max / exp-sum.
        x = jnp.where(lane < (num_classes - j * tC), x,
                      jnp.asarray(-jnp.inf, dtype=x.dtype))

    # Online logsumexp (running max m and running sum-of-exp l, both f32).
    m_prev = m_ref[...]
    tile_max = jnp.max(x, axis=1, keepdims=True).astype(jnp.float32)
    m_new = jnp.maximum(m_prev, tile_max)
    e = jnp.exp(x - m_new.astype(x.dtype))                # EUP in input dtype
    l_ref[...] = (l_ref[...] * jnp.exp(m_prev - m_new)
                  + jnp.sum(e.astype(jnp.float32), axis=1, keepdims=True))
    m_ref[...] = m_new

    # Masked row-gather of x[b, tgt[b]]; the target always lands in a valid
    # lane, and exactly one lane is hit, so the lane-sum is exact in any dtype.
    hit = lane == (tgt - j * tC)
    xg_ref[...] += jnp.sum(jnp.where(hit, x, 0.0),
                           axis=1, keepdims=True).astype(jnp.float32)

    @pl.when(j == n_class_tiles - 1)
    def _finalize():
        lse = m_ref[...] + jnp.log(l_ref[...])            # (tB, 1) logsumexp
        # w[tgt[b]] was gathered in the wrapper: per_row = -w[t]*log_softmax(x)[t].
        per_row = wt_ref[...] * (lse - xg_ref[...])
        # Mask rows past the true batch size. Garbage logits in a padded batch
        # tile may have produced Inf/NaN in lse/per_row; the select does not
        # propagate the dead branch, so the masked result stays finite.
        row = i * tB + jax.lax.broadcasted_iota(jnp.int32, (tB, 1), 0)
        per_row = jnp.where(row < num_rows, per_row, 0.0)
        partial = jnp.sum(per_row).reshape(1, 1, 1)
        # Lane-dense (8,128) write, once per batch tile.
        out_ref[...] = jnp.broadcast_to(partial, out_ref.shape)


def weight_cross_entropy(inputs, targets, weight, *, batch_tile=256, class_tile=None):
    """inputs: (B, C) float (f32 or bf16); targets: (B,) int; weight: (C,) float."""
    B, C = inputs.shape
    itemsize = jnp.dtype(inputs.dtype).itemsize
    vmem_cap = _vmem_capacity_bytes()

    # Batch tile: prefer >= 2 batch tiles so the "parallel" batch axis can
    # shard across both v7x TensorCores. (B <= 8 can't usefully be split.)
    if B > batch_tile:
        tB = batch_tile
    elif B > 8:
        tB = _round_up(pl.cdiv(B, 2), 8)
    else:
        tB = B

    if class_tile is None:
        # Stream ~8 MiB per grid step on 128 MiB-VMEM parts (v5e/v6e), ~4 MiB
        # on 64 MiB parts (v7x): amortizes the ~0.35 us grid-step overhead
        # while leaving room for double-buffering + compiler temporaries.
        target_bytes = (8 << 20) if vmem_cap >= (96 << 20) else (4 << 20)
        class_tile = max(512, ((target_bytes // (tB * itemsize)) // 128) * 128)

    tC = C if C <= class_tile else class_tile
    nB = pl.cdiv(B, tB)
    nC = pl.cdiv(C, tC)
    ragged = (C % tC) != 0

    targets_col = targets.astype(jnp.int32).reshape(B, 1)
    # Per-row weight gathered once here (removes a (1,C) stream + per-element
    # select + cross-lane sum from the VALU-bound kernel).
    w_t = weight.astype(jnp.float32)[targets].reshape(B, 1)

    # VMEM budget: 2x double-buffered logits tile + headroom for a few live
    # (tB,tC) element-wise temporaries, clamped to this generation's capacity.
    tile_bytes = tB * tC * itemsize
    needed = 6 * tile_bytes + (4 << 20)
    vmem_limit = int(min(max(needed, 16 << 20), vmem_cap - (8 << 20)))

    kernel = functools.partial(_weight_ce_kernel,
                               num_classes=C, num_rows=B, ragged=ragged)

    partials = pl.pallas_call(
        kernel,
        out_shape=jax.ShapeDtypeStruct((nB, 8, 128), jnp.float32),
        grid_spec=pltpu.PrefetchScalarGridSpec(
            num_scalar_prefetch=0,
            grid=(nB, nC),
            in_specs=[
                pl.BlockSpec((tB, tC), lambda i, j: (i, j)),   # logits tile
                pl.BlockSpec((tB, 1), lambda i, j: (i, 0)),    # targets column
                pl.BlockSpec((tB, 1), lambda i, j: (i, 0)),    # gathered weights
            ],
            out_specs=pl.BlockSpec((1, 8, 128), lambda i, j: (i, 0, 0)),
            scratch_shapes=[
                pltpu.VMEM((tB, 1), jnp.float32),   # running max m
                pltpu.VMEM((tB, 1), jnp.float32),   # running sum-of-exp l
                pltpu.VMEM((tB, 1), jnp.float32),   # gathered x[b, tgt[b]]
            ],
        ),
        compiler_params=pltpu.CompilerParams(
            dimension_semantics=("parallel", "arbitrary"),
            vmem_limit_bytes=vmem_limit,
        ),
    )(inputs, targets_col, w_t)

    # partials[i, 0, 0] = unnormalized sum for batch tile i; /B hoisted here.
    return jnp.sum(partials[:, 0, 0]) / jnp.float32(B)


def _reference(inputs, targets, weight):
    log_probs = jax.nn.log_softmax(inputs.astype(jnp.float32), axis=1)
    onehot = jax.nn.one_hot(targets, inputs.shape[1], dtype=jnp.float32)
    w = weight.astype(jnp.float32)[None, :]
    return jnp.sum(jnp.mean(-onehot * log_probs * w, axis=0))


if __name__ == "__main__":
    key = jax.random.PRNGKey(0)

    # --- Test 1: small shapes implied by the module: (batch, num_classes) logits.
    B, C = 8, 32
    k1, k2, k3 = jax.random.split(key, 3)
    inputs = jax.random.normal(k1, (B, C), dtype=jnp.float32)
    targets = jax.random.randint(k2, (B,), 0, C, dtype=jnp.int32)
    weight = jax.random.uniform(k3, (C,), dtype=jnp.float32, minval=0.5, maxval=1.5)

    loss = weight_cross_entropy(inputs, targets, weight)
    jax.block_until_ready(loss)
    ref = _reference(inputs, targets, weight)
    assert jnp.allclose(loss, ref, atol=1e-4, rtol=1e-4), (loss, ref)

    # --- Test 2: tiled / ragged online-logsumexp path (multiple batch tiles,
    # multiple class tiles, C not a multiple of 128).
    B2, C2 = 16, 300
    k4, k5, k6 = jax.random.split(jax.random.PRNGKey(1), 3)
    inputs2 = jax.random.normal(k4, (B2, C2), dtype=jnp.float32)
    targets2 = jax.random.randint(k5, (B2,), 0, C2, dtype=jnp.int32)
    weight2 = jax.random.uniform(k6, (C2,), dtype=jnp.float32, minval=0.5, maxval=1.5)

    loss2 = weight_cross_entropy(inputs2, targets2, weight2,
                                 batch_tile=8, class_tile=128)
    jax.block_until_ready(loss2)
    ref2 = _reference(inputs2, targets2, weight2)
    assert jnp.allclose(loss2, ref2, atol=1e-4, rtol=1e-4), (loss2, ref2)

    # --- Test 3: bf16 logits exercise the bf16 element-wise / f32-accumulate
    # path (looser tolerance for bf16 exp/sum precision).
    inputs3 = inputs2.astype(jnp.bfloat16)
    loss3 = weight_cross_entropy(inputs3, targets2, weight2)
    jax.block_until_ready(loss3)
    ref3 = _reference(inputs3, targets2, weight2)
    assert jnp.allclose(loss3, ref3, atol=3e-2, rtol=3e-2), (loss3, ref3)

    print("KERNEL_OK")
</pallas_src>

<mosaic_0001>
module attributes {stable_mosaic.version = 11 : i64} {
  func.func @_weight_ce_kernel(%arg0: i32, %arg1: i32, %arg2: memref<8x32xf32, #tpu.memory_space<vmem>>, %arg3: memref<8x1xi32, #tpu.memory_space<vmem>>, %arg4: memref<8x1xf32, #tpu.memory_space<vmem>>, %arg5: memref<1x8x128xf32, #tpu.memory_space<vmem>>, %arg6: memref<8x1xf32, #tpu.memory_space<vmem>>, %arg7: memref<8x1xf32, #tpu.memory_space<vmem>>, %arg8: memref<8x1xf32, #tpu.memory_space<vmem>>) attributes {dimension_semantics = [#tpu.dimension_semantics<parallel>, #tpu.dimension_semantics<arbitrary>], iteration_bounds = array<i64: 1, 1>, scalar_prefetch = 0 : i64, scratch_operands = 3 : i64, tpu.core_type = #tpu.core_type<tc>, window_params = [{transform_indices = @transform_0, window_bounds = array<i64: 8, 32>}, {transform_indices = @transform_1, window_bounds = array<i64: 8, 1>}, {transform_indices = @transform_2, window_bounds = array<i64: 8, 1>}, {transform_indices = @transform_3, window_bounds = array<i64: 1, 8, 128>}]} {
    %c0_i32 = arith.constant 0 : i32
    %0 = arith.cmpi eq, %arg1, %c0_i32 : i32
    %1 = arith.extui %0 : i1 to i32
    %c0_i32_0 = arith.constant 0 : i32
    %2 = arith.cmpi ne, %1, %c0_i32_0 : i32
    scf.if %2 {
      %cst_21 = arith.constant 0xFF800000 : f32
      %37 = vector.broadcast %cst_21 : f32 to vector<8x1xf32>
      %c0_22 = arith.constant 0 : index
      %c0_23 = arith.constant 0 : index
      %38 = vector.load %arg6[%c0_22, %c0_23] : memref<8x1xf32, #tpu.memory_space<vmem>>, vector<8x1xf32>
      tpu.vector_store %arg6[%c0_22, %c0_23], %37 {strides = array<i32>} : memref<8x1xf32, #tpu.memory_space<vmem>>, vector<8x1xf32>,
      %cst_24 = arith.constant 0.000000e+00 : f32
      %39 = vector.broadcast %cst_24 : f32 to vector<8x1xf32>
      %c0_25 = arith.constant 0 : index
      %c0_26 = arith.constant 0 : index
      %40 = vector.load %arg7[%c0_25, %c0_26] : memref<8x1xf32, #tpu.memory_space<vmem>>, vector<8x1xf32>
      tpu.vector_store %arg7[%c0_25, %c0_26], %39 {strides = array<i32>} : memref<8x1xf32, #tpu.memory_space<vmem>>, vector<8x1xf32>,
      %cst_27 = arith.constant 0.000000e+00 : f32
      %41 = vector.broadcast %cst_27 : f32 to vector<8x1xf32>
      %c0_28 = arith.constant 0 : index
      %c0_29 = arith.constant 0 : index
      %42 = vector.load %arg8[%c0_28, %c0_29] : memref<8x1xf32, #tpu.memory_space<vmem>>, vector<8x1xf32>
      tpu.vector_store %arg8[%c0_28, %c0_29], %41 {strides = array<i32>} : memref<8x1xf32, #tpu.memory_space<vmem>>, vector<8x1xf32>,
    } else {
    }
    %c0 = arith.constant 0 : index
    %c0_1 = arith.constant 0 : index
    %3 = vector.load %arg2[%c0, %c0_1] : memref<8x32xf32, #tpu.memory_space<vmem>>, vector<8x32xf32>
    %c0_2 = arith.constant 0 : index
    %c0_3 = arith.constant 0 : index
    %4 = vector.load %arg3[%c0_2, %c0_3] : memref<8x1xi32, #tpu.memory_space<vmem>>, vector<8x1xi32>
    %5 = tpu.iota {dimensions = array<i32: 1>} : vector<8x32xi32>
    %c0_4 = arith.constant 0 : index
    %c0_5 = arith.constant 0 : index
    %6 = vector.load %arg6[%c0_4, %c0_5] : memref<8x1xf32, #tpu.memory_space<vmem>>, vector<8x1xf32>
    %cst = arith.constant dense<0xFF800000> : vector<8xf32>
    %7 = vector.multi_reduction <maximumf>, %3, %cst [1] : vector<8x32xf32> to vector<8xf32>
    %8 = vector.shape_cast %7 : vector<8xf32> to vector<8x1xf32>
    %9 = arith.maximumf %6, %8 : vector<8x1xf32>
    %10 = vector.broadcast %9 : vector<8x1xf32> to vector<8x32xf32>
    %11 = arith.subf %3, %10 : vector<8x32xf32>
    %12 = math.exp %11 : vector<8x32xf32>
    %c0_6 = arith.constant 0 : index
    %c0_7 = arith.constant 0 : index
    %13 = vector.load %arg7[%c0_6, %c0_7] : memref<8x1xf32, #tpu.memory_space<vmem>>, vector<8x1xf32>
    %14 = arith.subf %6, %9 : vector<8x1xf32>
    %15 = math.exp %14 : vector<8x1xf32>
    %16 = arith.mulf %13, %15 : vector<8x1xf32>
    %cst_8 = arith.constant dense<0.000000e+00> : vector<8xf32>
    %17 = vector.multi_reduction <add>, %12, %cst_8 [1] : vector<8x32xf32> to vector<8xf32>
    %18 = vector.shape_cast %17 : vector<8xf32> to vector<8x1xf32>
    %19 = arith.addf %16, %18 : vector<8x1xf32>
    %c0_9 = arith.constant 0 : index
    %c0_10 = arith.constant 0 : index
    %20 = vector.load %arg7[%c0_9, %c0_10] : memref<8x1xf32, #tpu.memory_space<vmem>>, vector<8x1xf32>
    tpu.vector_store %arg7[%c0_9, %c0_10], %19 {strides = array<i32>} : memref<8x1xf32, #tpu.memory_space<vmem>>, vector<8x1xf32>,
    %c0_11 = arith.constant 0 : index
    %c0_12 = arith.constant 0 : index
    %21 = vector.load %arg6[%c0_11, %c0_12] : memref<8x1xf32, #tpu.memory_space<vmem>>, vector<8x1xf32>
    tpu.vector_store %arg6[%c0_11, %c0_12], %9 {strides = array<i32>} : memref<8x1xf32, #tpu.memory_space<vmem>>, vector<8x1xf32>,
    %c32_i32 = arith.constant 32 : i32
    %22 = arith.muli %arg1, %c32_i32 : i32
    %23 = vector.broadcast %22 : i32 to vector<8x1xi32>
    %24 = arith.subi %4, %23 : vector<8x1xi32>
    %25 = vector.broadcast %24 : vector<8x1xi32> to vector<8x32xi32>
    %26 = arith.cmpi eq, %5, %25 : vector<8x32xi32>
    %c0_13 = arith.constant 0 : index
    %c0_14 = arith.constant 0 : index
    %27 = vector.load %arg8[%c0_13, %c0_14] : memref<8x1xf32, #tpu.memory_space<vmem>>, vector<8x1xf32>
    %cst_15 = arith.constant 0.000000e+00 : f32
    %28 = vector.broadcast %cst_15 : f32 to vector<8x32xf32>
    %29 = arith.select %26, %3, %28 : vector<8x32xi1>, vector<8x32xf32>
    %cst_16 = arith.constant dense<0.000000e+00> : vector<8xf32>
    %30 = vector.multi_reduction <add>, %29, %cst_16 [1] : vector<8x32xf32> to vector<8xf32>
    %31 = vector.shape_cast %30 : vector<8xf32> to vector<8x1xf32>
    %32 = arith.addf %27, %31 : vector<8x1xf32>
    %c0_17 = arith.constant 0 : index
    %c0_18 = arith.constant 0 : index
    %33 = vector.load %arg8[%c0_17, %c0_18] : memref<8x1xf32, #tpu.memory_space<vmem>>, vector<8x1xf32>
    tpu.vector_store %arg8[%c0_17, %c0_18], %32 {strides = array<i32>} : memref<8x1xf32, #tpu.memory_space<vmem>>, vector<8x1xf32>,
    %c0_i32_19 = arith.constant 0 : i32
    %34 = arith.cmpi eq, %arg1, %c0_i32_19 : i32
    %35 = arith.extui %34 : i1 to i32
    %c0_i32_20 = arith.constant 0 : i32
    %36 = arith.cmpi ne, %35, %c0_i32_20 : i32
    scf.if %36 {
      %c0_21 = arith.constant 0 : index
      %c0_22 = arith.constant 0 : index
      %37 = vector.load %arg6[%c0_21, %c0_22] : memref<8x1xf32, #tpu.memory_space<vmem>>, vector<8x1xf32>
      %c0_23 = arith.constant 0 : index
      %c0_24 = arith.constant 0 : index
      %38 = vector.load %arg7[%c0_23, %c0_24] : memref<8x1xf32, #tpu.memory_space<vmem>>, vector<8x1xf32>
      %39 = math.log %38 : vector<8x1xf32>
      %40 = arith.addf %37, %39 : vector<8x1xf32>
      %c0_25 = arith.constant 0 : index
      %c0_26 = arith.constant 0 : index
      %41 = vector.load %arg4[%c0_25, %c0_26] : memref<8x1xf32, #tpu.memory_space<vmem>>, vector<8x1xf32>
      %c0_27 = arith.constant 0 : index
      %c0_28 = arith.constant 0 : index
      %42 = vector.load %arg8[%c0_27, %c0_28] : memref<8x1xf32, #tpu.memory_space<vmem>>, vector<8x1xf32>
      %43 = arith.subf %40, %42 : vector<8x1xf32>
      %44 = arith.mulf %41, %43 : vector<8x1xf32>
      %c8_i32 = arith.constant 8 : i32
      %45 = arith.muli %arg0, %c8_i32 : i32
      %46 = tpu.iota {dimensions = array<i32: 0>} : vector<8x1xi32>
      %47 = vector.broadcast %45 : i32 to vector<8x1xi32>
      %48 = arith.addi %47, %46 : vector<8x1xi32>
      %c8_i32_29 = arith.constant 8 : i32
      %49 = vector.broadcast %c8_i32_29 : i32 to vector<8x1xi32>
      %50 = arith.cmpi slt, %48, %49 : vector<8x1xi32>
      %cst_30 = arith.constant 0.000000e+00 : f32
      %51 = vector.broadcast %cst_30 : f32 to vector<8x1xf32>
      %52 = arith.select %50, %44, %51 : vector<8x1xi1>, vector<8x1xf32>
      %53 = vector.shape_cast %52 : vector<8x1xf32> to vector<1x8x1xf32>
      %cst_31 = arith.constant dense<0.000000e+00> : vector<1xf32>
      %54 = vector.multi_reduction <add>, %53, %cst_31 [1, 2] : vector<1x8x1xf32> to vector<1xf32>
      %55 = vector.shape_cast %54 : vector<1xf32> to vector<1x1x1xf32>
      %56 = vector.extract %55[0, 0, 0] : f32 from vector<1x1x1xf32>
      %57 = vector.broadcast %56 : f32 to vector<1x1x1xf32>
      %58 = vector.shape_cast %57 : vector<1x1x1xf32> to vector<1x1x1xf32>
      %59 = vector.broadcast %58 : vector<1x1x1xf32> to vector<1x8x128xf32>
      %c0_32 = arith.constant 0 : index
      %c0_33 = arith.constant 0 : index
      %c0_34 = arith.constant 0 : index
      %60 = vector.load %arg5[%c0_32, %c0_33, %c0_34] : memref<1x8x128xf32, #tpu.memory_space<vmem>>, vector<1x8x128xf32>
      tpu.vector_store %arg5[%c0_32, %c0_33, %c0_34], %59 {strides = array<i32>} : memref<1x8x128xf32, #tpu.memory_space<vmem>>, vector<1x8x128xf32>,
    } else {
    }
    return
  }
  func.func @transform_0(%arg0: i32, %arg1: i32) -> (i32, i32) {
    %c0_i32 = arith.constant 0 : i32
    return %arg0, %arg1 : i32, i32
  }
  func.func @transform_1(%arg0: i32, %arg1: i32) -> (i32, i32) {
    %c0_i32 = arith.constant 0 : i32
    %c0_i32_0 = arith.constant 0 : i32
    return %arg0, %c0_i32 : i32, i32
  }
  func.func @transform_2(%arg0: i32, %arg1: i32) -> (i32, i32) {
    %c0_i32 = arith.constant 0 : i32
    %c0_i32_0 = arith.constant 0 : i32
    return %arg0, %c0_i32 : i32, i32
  }
  func.func @transform_3(%arg0: i32, %arg1: i32) -> (i32, i32, i32) {
    %c0_i32 = arith.constant 0 : i32
    %c0_i32_0 = arith.constant 0 : i32
    %c0_i32_1 = arith.constant 0 : i32
    return %arg0, %c0_i32, %c0_i32_0 : i32, i32, i32
  }
}

</mosaic_0001>

<llo_original>
// kernel: tpu_custom_call.1
$region0: #{tpu_custom_call.1}
  #allocation0 [shape = 'u32[]', space=smem, size = 0x4, offset = 0x4, fixed_abs, tag = 'smem constant byte address 0x4 - core index']
  #allocation1 [shape = 'u32[144,128]{1,0:T(1,128)}', space=vmem, size = 0x12000, scoped, tag = 'internal scratch']
  #allocation2 [shape = 'f32[8,1]{1,0:T(8,128)}', space=vmem, size = 0x1000, scoped, tag = 'scratch operand']
  #allocation3 [shape = 'f32[8,1]{1,0:T(8,128)}', space=vmem, size = 0x1000, scoped, tag = 'scratch operand']
  #allocation4 [shape = 'f32[8,1]{1,0:T(8,128)}', space=vmem, size = 0x1000, scoped, tag = 'scratch operand']
  %s0 = inlined_call_operand.vmem [shape: f32[8,32], index: 0, kind: input, shape index: {}]
  %s1 = inlined_call_operand.vmem [shape: s32[8,1], index: 1, kind: input, shape index: {}]
  %s2 = inlined_call_operand.vmem [shape: f32[8,1], index: 2, kind: input, shape index: {}]
  %s3 = inlined_call_operand.hbm [shape: f32[1,8,128], index: 3, kind: output, shape index: {}]
  %s4 = sld [smem:[#allocation0]]
  $region30: #{tpu_custom_call.1} parent=0
    _
  %s6 = ssub.s32 1, %s4
  %s7 = scalar_select 0, %s6, %s4
  $region1: #{tpu_custom_call.1} parent=0
    #allocation5 [shape = 'u8[4096]{0}', space=vmem, size = 0x1000, scoped, tag = 'output window, operand 0, single buffered']
    #allocation6 [shape = 's32[1]{0}', space=sflag, size = 0x4, scoped, tag = 'scoped memory for tpu_custom_call.1']
    %8 = vsyncpa [#allocation6], 0
    // Predicated region
    $region2: #{tpu_custom_call.1} parent=1 // pred_check
      _
    $region3: #{tpu_custom_call.1} parent=1 // pred_check_branch
      %10 = sbr.rel (0) target = $region5
    $region4: #{tpu_custom_call.1} parent=1 // pred_region
      _
    $region5: #{tpu_custom_call.1} parent=1 // pred_fallthru
      _
    // Predicated region
    $region6: #{tpu_custom_call.1} parent=1 // pred_check
      _
    $region7: #{tpu_custom_call.1} parent=1 // pred_check_branch
      %12 = sbr.rel (0) target = $region9
    $region8: #{tpu_custom_call.1} parent=1 // pred_region
      _
    $region9: #{tpu_custom_call.1} parent=1 // pred_fallthru
      _
    // Predicated region
    $region10: #{tpu_custom_call.1} parent=1 // pred_check
      _
    $region11: #{tpu_custom_call.1} parent=1 // pred_check_branch
      %14 = sbr.rel (0) target = $region13
    $region12: #{tpu_custom_call.1} parent=1 // pred_region
      _
    $region13: #{tpu_custom_call.1} parent=1 // pred_fallthru
      _
    %p15 = scmp.eq.s32.totalorder 0, 0
    // Predicated region
    $region14: #{tpu_custom_call.1} parent=1 // pred_check
      %p16 = pneg %p15
    $region15: #{tpu_custom_call.1} parent=1 // pred_check_branch
      %18 = sbr.rel (%p16) target = $region17
    $region16: #{tpu_custom_call.1} parent=1 // pred_region
      %vm19 = vcmask 7168
      %20 = vst.msk [vmem:[#allocation2] sm:$0xff] %vm19, -inf
      %21 = vst.msk [vmem:[#allocation3] sm:$0xff] %vm19, 0.0
      %22 = vst.msk [vmem:[#allocation4] sm:$0xff] %vm19, 0.0
    $region17: #{tpu_custom_call.1} parent=1 // pred_fallthru
      _
    %v23 = vld [vmem:[%s0] sm:$0xff]
    %v24 = vld [vmem:[%s1] sm:$0xff]
    %v25 = vlaneseq
    %v26 = vand.u32 %v25, 127
    %v27 = vld [vmem:[#allocation2] sm:$0xff]
    %vm28 = vcmask 261120
    %v29 = vsel %vm28, %v23, -inf
    %30 = vmax.xlane.f32.xlu0 %v29
    %v31 = vpop.xlane.xlu0 %30
    %v32 = vmax.f32 %v27, %v31
    %34 = vset.pattern.permute.xlu0 0
    %35 = vperm.xlu0 %34, %v32
    %v36 = vpop.permute.xlu0 %35
    %v38 = vsub.f32 %v23, %v36
    %v39 = vmul.f32 %v38, 1.442695
    %v40 = vpow.pop %v39
    %v41 = vld [vmem:[#allocation3] sm:$0xff]
    %v42 = vsub.f32 %v27, %v32
    %v43 = vmul.f32 %v42, 1.442695
    %v44 = vpow.pop %v43
    %v45 = vmul.f32 %v41, %v44
    %v46 = vsel %vm28, %v40, 0.0
    %47 = vadd.xlane.f32.xlu0 %v46
    %v48 = vpop.xlane.xlu0 %47
    %v49 = vadd.f32 %v45, %v48
    %vm50 = vcmask 7168
    %51 = vst.msk [vmem:[#allocation3] sm:$0xff] %vm50, %v49
    %52 = vst.msk [vmem:[#allocation2] sm:$0xff] %vm50, %v32
    %s53 = smul.u32 0, 32
    %v54 = vstv %s53
    %v55 = vsub.s32 %v24, %v54
    %56 = vset.pattern.permute.xlu0 0
    %57 = vperm.xlu0 %56, %v55
    %v58 = vpop.permute.xlu0 %57
    %vm59 = vcmp.eq.s32.totalorder %v26, %v58
    %v60 = vld [vmem:[#allocation4] sm:$0xff]
    %v61 = vsel %vm59, %v23, 0.0
    %v62 = vsel %vm28, %v61, 0.0
    %63 = vadd.xlane.f32.xlu0 %v62
    %v64 = vpop.xlane.xlu0 %63
    %v65 = vadd.f32 %v60, %v64
    %66 = vst.msk [vmem:[#allocation4] sm:$0xff] %vm50, %v65
    // Predicated region
    $region18: #{tpu_custom_call.1} parent=1 // pred_check
      %p67 = pneg %p15
    $region19: #{tpu_custom_call.1} parent=1 // pred_check_branch
      %69 = sbr.rel (%p67) target = $region21
    $region20: #{tpu_custom_call.1} parent=1 // pred_region
      %v70 = vld [vmem:[#allocation2] sm:$0xff]
      %v71 = vld [vmem:[#allocation3] sm:$0xff]
      %v72 = vlog2.pop %v71
      %v73 = vmul.f32 %v72, 0.6931472
      %v74 = vadd.f32 %v70, %v73
      %v75 = vld [vmem:[%s2] sm:$0xff]
      %v76 = vld [vmem:[#allocation4] sm:$0xff]
      %v77 = vsub.f32 %v74, %v76
      %v78 = vmul.f32 %v75, %v77
      %s79 = smul.u32 0, 8
      %v80 = vlaneseq
      %v81 = vshrl.u32 %v80, 7
      %v82 = vstv %s79
      %v83 = vadd.s32 %v82, %v81
      %vm84 = vcmp.lt.s32.totalorder %v83, 8
      %v85 = vsel %vm84, %v78, 0.0
      %v86 = vsel %vm50, %v85, 0.0
      %87 = vadd.xlane.f32.xlu0 %v86
      %v88 = vpop.xlane.xlu0 %87
      %v89 = vrot.slane %v88, 4
      %v90 = vadd.f32 %v88, %v89
      %v91 = vrot.slane %v90, 2
      %v92 = vadd.f32 %v90, %v91
      %v93 = vrot.slane %v92, 1
      %v94 = vadd.f32 %v92, %v93
      %s95 = vtos %v94
      %v96 = vstv %s95
      %97 = vst [vmem:[#allocation5] sm:$0xff] %v96
    $region21: #{tpu_custom_call.1} parent=1 // pred_fallthru
      _
    // Predicated region
    $region22: #{tpu_custom_call.1} parent=1 // pred_check
      _
    $region23: #{tpu_custom_call.1} parent=1 // pred_check_branch
      %99 = sbr.rel (0) target = $region25
    $region24: #{tpu_custom_call.1} parent=1 // pred_region
      %s101 = ssub.s32 128, 128
      %102 = vsyncadd [#allocation6], %s101
      %s104 = sshll.u32 [#allocation5], 4
      %s105 = int_to_ptr.vmem [resolvable:$true] %s104
      %107 = dma.vmem_to_hbm [thread:$0]  %s105, 128, %s3, [#allocation6]
    $region25: #{tpu_custom_call.1} parent=1 // pred_fallthru
      _
    // Predicated region
    $region26: #{tpu_custom_call.1} parent=1 // pred_check
      _
    $region27: #{tpu_custom_call.1} parent=1 // pred_check_branch
      %109 = sbr.rel (0) target = $region29
    $region28: #{tpu_custom_call.1} parent=1 // pred_region
      %110 = dma.done [#allocation6], 128
    $region29: #{tpu_custom_call.1} parent=1 // pred_fallthru
      _
    %111 = vsyncpa [#allocation6], 1

</llo_original>
